<compile_context>
chip_gen: v7x
topology: tpu7x:2x2x1
jax: 0.10.0
libtpu: 0.0.40
codegen_flags: <defaults>
</compile_context>

<pallas_src>
import functools

import jax
import jax.numpy as jnp
from jax.experimental import pallas as pl
from jax.experimental.pallas import tpu as pltpu


def _round_up(n, m):
    return ((n + m - 1) // m) * m


def _mlp_kernel(x_ref, w1_ref, w2_ref, w3_ref, w4_ref, b_ref, o_ref):
    """One batch tile of the fused 4x(Linear + ReLU) MLP."""
    d_h = w1_ref.shape[1]      # padded hidden width
    d_out = w4_ref.shape[1]    # padded output width

    def linear_relu(h, w_ref, row, width):
        # bf16 operands feed the MXU at full rate; accumulate in f32.
        y = jnp.dot(h.astype(jnp.bfloat16), w_ref[...],
                    preferred_element_type=jnp.float32)
        y = y + b_ref[row:row + 1, :width]   # (1, width) broadcast over batch
        return jnp.maximum(y, 0.0)           # f32 bias + ReLU on the VPU

    h = x_ref[...]                           # (TB, d_in_p) bf16
    h = linear_relu(h, w1_ref, 0, d_h)
    h = linear_relu(h, w2_ref, 1, d_h)
    h = linear_relu(h, w3_ref, 2, d_h)
    h = linear_relu(h, w4_ref, 3, d_out)
    o_ref[...] = h.astype(o_ref.dtype)


def _pad2(a, rows, cols, dtype):
    out = jnp.zeros((rows, cols), dtype)
    return out.at[:a.shape[0], :a.shape[1]].set(a.astype(dtype))


@functools.partial(jax.jit, static_argnames=("tb",))
def embedding_watchman_mlp(x, params, *, tb=512):
    """x: (batch, input_dim) f32.  params: dict of w1..w4 (in,out) and b1..b4."""
    w1, b1 = params["w1"], params["b1"]
    w2, b2 = params["w2"], params["b2"]
    w3, b3 = params["w3"], params["b3"]
    w4, b4 = params["w4"], params["b4"]

    batch, d_in = x.shape
    d_h = w1.shape[1]
    d_out = w4.shape[1]

    # Lane-dense padding: every feature axis -> multiple of 128.
    d_in_p = _round_up(d_in, 128)
    d_h_p = _round_up(d_h, 128)
    d_out_p = _round_up(d_out, 128)
    d_bmax = max(d_h_p, d_out_p)

    # Batch tile: multiple of 8 sublanes, capped at `tb` rows.
    tb_eff = _round_up(min(tb, batch), 8)
    batch_p = _round_up(batch, tb_eff)
    grid = (batch_p // tb_eff,)

    # Pad + cast operands.  Padded lanes are exact zeros, so they stay inert
    # through matmul / bias / ReLU of every layer.
    x_p = jnp.zeros((batch_p, d_in_p), jnp.bfloat16).at[:batch, :d_in].set(
        x.astype(jnp.bfloat16))
    w1_p = _pad2(w1, d_in_p, d_h_p, jnp.bfloat16)
    w2_p = _pad2(w2, d_h_p, d_h_p, jnp.bfloat16)
    w3_p = _pad2(w3, d_h_p, d_h_p, jnp.bfloat16)
    w4_p = _pad2(w4, d_h_p, d_out_p, jnp.bfloat16)
    b_pack = (jnp.zeros((4, d_bmax), jnp.float32)
              .at[0, :d_h].set(b1)
              .at[1, :d_h].set(b2)
              .at[2, :d_h].set(b3)
              .at[3, :d_out].set(b4))

    resident = lambda a: pl.BlockSpec(a.shape, lambda i: (0, 0))

    # Rough VMEM budget: double-buffered IO tiles + resident weights/biases +
    # live f32 activations; clamp to stay under v7x's 64 MiB physical VMEM.
    est = (2 * tb_eff * d_in_p * 2                     # x tiles (bf16, 2 bufs)
           + 2 * tb_eff * d_out_p * 4                  # out tiles (f32, 2 bufs)
           + 2 * 2 * (d_in_p * d_h_p + 2 * d_h_p * d_h_p + d_h_p * d_out_p)
           + 2 * 4 * 4 * d_bmax                        # packed biases
           + 3 * tb_eff * max(d_in_p, d_h_p, d_out_p) * 4)
    vmem_limit = int(min(max(2 * est, 32 << 20), 56 << 20))

    out_p = pl.pallas_call(
        _mlp_kernel,
        out_shape=jax.ShapeDtypeStruct((batch_p, d_out_p), jnp.float32),
        grid=grid,
        in_specs=[pl.BlockSpec((tb_eff, d_in_p), lambda i: (i, 0)),
                  resident(w1_p), resident(w2_p),
                  resident(w3_p), resident(w4_p),
                  resident(b_pack)],
        out_specs=pl.BlockSpec((tb_eff, d_out_p), lambda i: (i, 0)),
        compiler_params=pltpu.CompilerParams(
            dimension_semantics=("parallel",),
            vmem_limit_bytes=vmem_limit),
    )(x_p, w1_p, w2_p, w3_p, w4_p, b_pack)

    return out_p[:batch, :d_out]


def init_params(key, input_dim, hidden_size, output_size):
    """Deterministic synthetic init (Kaiming-uniform-ish), stored as (in, out)."""
    dims = [(input_dim, hidden_size),
            (hidden_size, hidden_size),
            (hidden_size, hidden_size),
            (hidden_size, output_size)]
    params = {}
    for i, (din, dout) in enumerate(dims, start=1):
        key, kw, kb = jax.random.split(key, 3)
        bound = 1.0 / jnp.sqrt(jnp.float32(din))
        # PyTorch Linear weight is (out, in); we directly build its transpose.
        params[f"w{i}"] = jax.random.uniform(
            kw, (din, dout), jnp.float32, minval=-bound, maxval=bound)
        params[f"b{i}"] = jax.random.uniform(
            kb, (dout,), jnp.float32, minval=-bound, maxval=bound)
    return params


def _reference(x, params):
    """Pure f32 reference matching the PyTorch module semantics."""
    h = x
    for i in range(1, 5):
        h = jnp.maximum(h @ params[f"w{i}"] + params[f"b{i}"], 0.0)
    return h


if __name__ == "__main__":
    key = jax.random.PRNGKey(0)
    k_x, k_p = jax.random.split(key)

    batch, input_dim, hidden_size, output_size = 48, 16, 32, 8
    x = jax.random.normal(k_x, (batch, input_dim), jnp.float32)
    params = init_params(k_p, input_dim, hidden_size, output_size)

    # tb=16 -> 3-step batch grid, exercising the streaming / pipelined path.
    out = embedding_watchman_mlp(x, params, tb=16)
    out = jax.block_until_ready(out)

    ref = _reference(x, params)
    assert out.shape == (batch, output_size)
    # bf16 MXU operands with f32 accumulation: allow ~1e-2 relative error.
    assert jnp.allclose(out, ref, atol=5e-2, rtol=5e-2), "mismatch vs reference"

    print("KERNEL_OK")
</pallas_src>

<mosaic_0001>
module attributes {stable_mosaic.version = 11 : i64} {
  func.func @_mlp_kernel(%arg0: i32, %arg1: memref<16x128xbf16, #tpu.memory_space<vmem>>, %arg2: memref<128x128xbf16, #tpu.memory_space<vmem>>, %arg3: memref<128x128xbf16, #tpu.memory_space<vmem>>, %arg4: memref<128x128xbf16, #tpu.memory_space<vmem>>, %arg5: memref<128x128xbf16, #tpu.memory_space<vmem>>, %arg6: memref<4x128xf32, #tpu.memory_space<vmem>>, %arg7: memref<16x128xf32, #tpu.memory_space<vmem>>) attributes {dimension_semantics = [#tpu.dimension_semantics<parallel>], iteration_bounds = array<i64: 3>, scalar_prefetch = 0 : i64, scratch_operands = 0 : i64, tpu.core_type = #tpu.core_type<tc>, window_params = [{transform_indices = @transform_0, window_bounds = array<i64: 16, 128>}, {pipeline_mode = #tpu.pipeline_mode<synchronous>, transform_indices = @transform_1, window_bounds = array<i64: 128, 128>}, {pipeline_mode = #tpu.pipeline_mode<synchronous>, transform_indices = @transform_2, window_bounds = array<i64: 128, 128>}, {pipeline_mode = #tpu.pipeline_mode<synchronous>, transform_indices = @transform_3, window_bounds = array<i64: 128, 128>}, {pipeline_mode = #tpu.pipeline_mode<synchronous>, transform_indices = @transform_4, window_bounds = array<i64: 128, 128>}, {pipeline_mode = #tpu.pipeline_mode<synchronous>, transform_indices = @transform_5, window_bounds = array<i64: 4, 128>}, {transform_indices = @transform_6, window_bounds = array<i64: 16, 128>}]} {
    %c0 = arith.constant 0 : index
    %c0_0 = arith.constant 0 : index
    %0 = vector.load %arg1[%c0, %c0_0] : memref<16x128xbf16, #tpu.memory_space<vmem>>, vector<16x128xbf16>
    %c0_1 = arith.constant 0 : index
    %c0_2 = arith.constant 0 : index
    %1 = vector.load %arg2[%c0_1, %c0_2] : memref<128x128xbf16, #tpu.memory_space<vmem>>, vector<128x128xbf16>
    %cst = arith.constant dense<0.000000e+00> : vector<16x128xf32>
    %2 = tpu.matmul %0, %1, %cst {dimension_numbers = #tpu.dot_dimension_numbers<[1], [0], [0], [1], [0, 0, 1, 1], [], []>} : vector<16x128xbf16>, vector<128x128xbf16>, vector<16x128xf32> -> vector<16x128xf32>
    %c0_3 = arith.constant 0 : index
    %c0_4 = arith.constant 0 : index
    %3 = vector.load %arg6[%c0_3, %c0_4] : memref<4x128xf32, #tpu.memory_space<vmem>>, vector<1x128xf32>
    %4 = vector.broadcast %3 : vector<1x128xf32> to vector<16x128xf32>
    %5 = arith.addf %2, %4 : vector<16x128xf32>
    %cst_5 = arith.constant 0.000000e+00 : f32
    %6 = vector.broadcast %cst_5 : f32 to vector<16x128xf32>
    %7 = arith.maximumf %5, %6 : vector<16x128xf32>
    %8 = arith.truncf %7 : vector<16x128xf32> to vector<16x128xbf16>
    %c0_6 = arith.constant 0 : index
    %c0_7 = arith.constant 0 : index
    %9 = vector.load %arg3[%c0_6, %c0_7] : memref<128x128xbf16, #tpu.memory_space<vmem>>, vector<128x128xbf16>
    %cst_8 = arith.constant dense<0.000000e+00> : vector<16x128xf32>
    %10 = tpu.matmul %8, %9, %cst_8 {dimension_numbers = #tpu.dot_dimension_numbers<[1], [0], [0], [1], [0, 0, 1, 1], [], []>} : vector<16x128xbf16>, vector<128x128xbf16>, vector<16x128xf32> -> vector<16x128xf32>
    %c1 = arith.constant 1 : index
    %c0_9 = arith.constant 0 : index
    %11 = vector.load %arg6[%c1, %c0_9] : memref<4x128xf32, #tpu.memory_space<vmem>>, vector<1x128xf32>
    %12 = vector.broadcast %11 : vector<1x128xf32> to vector<16x128xf32>
    %13 = arith.addf %10, %12 : vector<16x128xf32>
    %cst_10 = arith.constant 0.000000e+00 : f32
    %14 = vector.broadcast %cst_10 : f32 to vector<16x128xf32>
    %15 = arith.maximumf %13, %14 : vector<16x128xf32>
    %16 = arith.truncf %15 : vector<16x128xf32> to vector<16x128xbf16>
    %c0_11 = arith.constant 0 : index
    %c0_12 = arith.constant 0 : index
    %17 = vector.load %arg4[%c0_11, %c0_12] : memref<128x128xbf16, #tpu.memory_space<vmem>>, vector<128x128xbf16>
    %cst_13 = arith.constant dense<0.000000e+00> : vector<16x128xf32>
    %18 = tpu.matmul %16, %17, %cst_13 {dimension_numbers = #tpu.dot_dimension_numbers<[1], [0], [0], [1], [0, 0, 1, 1], [], []>} : vector<16x128xbf16>, vector<128x128xbf16>, vector<16x128xf32> -> vector<16x128xf32>
    %c2 = arith.constant 2 : index
    %c0_14 = arith.constant 0 : index
    %19 = vector.load %arg6[%c2, %c0_14] : memref<4x128xf32, #tpu.memory_space<vmem>>, vector<1x128xf32>
    %20 = vector.broadcast %19 : vector<1x128xf32> to vector<16x128xf32>
    %21 = arith.addf %18, %20 : vector<16x128xf32>
    %cst_15 = arith.constant 0.000000e+00 : f32
    %22 = vector.broadcast %cst_15 : f32 to vector<16x128xf32>
    %23 = arith.maximumf %21, %22 : vector<16x128xf32>
    %24 = arith.truncf %23 : vector<16x128xf32> to vector<16x128xbf16>
    %c0_16 = arith.constant 0 : index
    %c0_17 = arith.constant 0 : index
    %25 = vector.load %arg5[%c0_16, %c0_17] : memref<128x128xbf16, #tpu.memory_space<vmem>>, vector<128x128xbf16>
    %cst_18 = arith.constant dense<0.000000e+00> : vector<16x128xf32>
    %26 = tpu.matmul %24, %25, %cst_18 {dimension_numbers = #tpu.dot_dimension_numbers<[1], [0], [0], [1], [0, 0, 1, 1], [], []>} : vector<16x128xbf16>, vector<128x128xbf16>, vector<16x128xf32> -> vector<16x128xf32>
    %c3 = arith.constant 3 : index
    %c0_19 = arith.constant 0 : index
    %27 = vector.load %arg6[%c3, %c0_19] : memref<4x128xf32, #tpu.memory_space<vmem>>, vector<1x128xf32>
    %28 = vector.broadcast %27 : vector<1x128xf32> to vector<16x128xf32>
    %29 = arith.addf %26, %28 : vector<16x128xf32>
    %cst_20 = arith.constant 0.000000e+00 : f32
    %30 = vector.broadcast %cst_20 : f32 to vector<16x128xf32>
    %31 = arith.maximumf %29, %30 : vector<16x128xf32>
    %c0_21 = arith.constant 0 : index
    %c0_22 = arith.constant 0 : index
    %32 = vector.load %arg7[%c0_21, %c0_22] : memref<16x128xf32, #tpu.memory_space<vmem>>, vector<16x128xf32>
    tpu.vector_store %arg7[%c0_21, %c0_22], %31 {strides = array<i32>} : memref<16x128xf32, #tpu.memory_space<vmem>>, vector<16x128xf32>,
    return
  }
  func.func @transform_0(%arg0: i32) -> (i32, i32) {
    %c0_i32 = arith.constant 0 : i32
    %c0_i32_0 = arith.constant 0 : i32
    return %arg0, %c0_i32 : i32, i32
  }
  func.func @transform_1(%arg0: i32) -> (i32, i32) {
    %c0_i32 = arith.constant 0 : i32
    %c0_i32_0 = arith.constant 0 : i32
    %c0_i32_1 = arith.constant 0 : i32
    return %c0_i32, %c0_i32_0 : i32, i32
  }
  func.func @transform_2(%arg0: i32) -> (i32, i32) {
    %c0_i32 = arith.constant 0 : i32
    %c0_i32_0 = arith.constant 0 : i32
    %c0_i32_1 = arith.constant 0 : i32
    return %c0_i32, %c0_i32_0 : i32, i32
  }
  func.func @transform_3(%arg0: i32) -> (i32, i32) {
    %c0_i32 = arith.constant 0 : i32
    %c0_i32_0 = arith.constant 0 : i32
    %c0_i32_1 = arith.constant 0 : i32
    return %c0_i32, %c0_i32_0 : i32, i32
  }
  func.func @transform_4(%arg0: i32) -> (i32, i32) {
    %c0_i32 = arith.constant 0 : i32
    %c0_i32_0 = arith.constant 0 : i32
    %c0_i32_1 = arith.constant 0 : i32
    return %c0_i32, %c0_i32_0 : i32, i32
  }
  func.func @transform_5(%arg0: i32) -> (i32, i32) {
    %c0_i32 = arith.constant 0 : i32
    %c0_i32_0 = arith.constant 0 : i32
    %c0_i32_1 = arith.constant 0 : i32
    return %c0_i32, %c0_i32_0 : i32, i32
  }
  func.func @transform_6(%arg0: i32) -> (i32, i32) {
    %c0_i32 = arith.constant 0 : i32
    %c0_i32_0 = arith.constant 0 : i32
    return %arg0, %c0_i32 : i32, i32
  }
}

</mosaic_0001>

<llo_original>
// kernel: embedding_watchman_mlp.1
$region0: #{embedding_watchman_mlp.1}
  #allocation0 [shape = 'u32[]', space=smem, size = 0x4, offset = 0x4, fixed_abs, tag = 'smem constant byte address 0x4 - core index']
  #allocation1 [shape = 'u32[144,128]{1,0:T(1,128)}', space=vmem, size = 0x12000, scoped, tag = 'internal scratch']
  %s0 = inlined_call_operand.vmem [shape: bf16[48,128], index: 0, kind: input, shape index: {}]
  %s1 = inlined_call_operand.vmem [shape: bf16[128,128], index: 1, kind: input, shape index: {}]
  %s2 = inlined_call_operand.vmem [shape: bf16[128,128], index: 2, kind: input, shape index: {}]
  %s3 = inlined_call_operand.vmem [shape: bf16[128,128], index: 3, kind: input, shape index: {}]
  %s4 = inlined_call_operand.vmem [shape: bf16[128,128], index: 4, kind: input, shape index: {}]
  %s5 = inlined_call_operand.vmem [shape: f32[4,128], index: 5, kind: input, shape index: {}]
  %s6 = inlined_call_operand.vmem [shape: f32[48,128], index: 6, kind: output, shape index: {}]
  %s7 = sld [smem:[#allocation0]]
  $region57: #{embedding_watchman_mlp.1} parent=0
    _
  %s9 = ssub.s32 1, %s7
  %s10 = scalar_select 0, %s9, %s7
  loop: start=0, step=1, limit=5
  $region2: #{embedding_watchman_mlp.1} parent=0 // loop_pre_header
    _
  $region3: #{embedding_watchman_mlp.1} parent=0 // loop_header
    %s12 = sphi 0, %s16
    %p13 = scmp.ge.s32.totalorder %s12, 5
    %s22 = sphi 0, %s24
    %s25 = sphi 0, %s22
    %s26 = sphi 0, %s25
    %s42 = sphi 0, %s26
    %s46 = sphi 0, %s46
    %s48 = sphi 0, %s46
    %s49 = sphi 0, %s48
    %s63 = sphi 0, %s49
    %s67 = sphi 0, %s67
    %s69 = sphi 0, %s67
    %s70 = sphi 0, %s69
    %s84 = sphi 0, %s70
    %s88 = sphi 0, %s88
    %s90 = sphi 0, %s88
    %s91 = sphi 0, %s90
    %s105 = sphi 0, %s91
    %s109 = sphi 0, %s109
    %s111 = sphi 0, %s109
    %s112 = sphi 0, %s111
    %s126 = sphi 0, %s112
    %s130 = sphi 0, %s130
    %s132 = sphi 0, %s130
    %s133 = sphi 0, %s132
    %s147 = sphi 0, %s133
    %s153 = sphi 0, %s155
    %s156 = sphi 0, %s153
    %s157 = sphi 0, %s156
    %s173 = sphi 0, %s157
  $region4: #{embedding_watchman_mlp.1} parent=0 // loop_header_branch
    %15 = sbr.rel (%p13) target = $region8
  $region5: #{embedding_watchman_mlp.1} parent=0 // loop_body
    %s17 = ssub.s32 %s12, 1
    %s18 = ssub.s32 %s12, 2
    %s19 = sadd.s32 %s12, 1
    %s20 = ssub.s32 %s12, %s19
    %p21 = scmp.eq.s32.totalorder %s20, 0
    %s23 = sadd.s32 %s22, 1
    %s24 = scalar_select %p21, %s22, %s23
    %p27 = pneg %p21
    %p28 = scmp.eq.s32.totalorder %s12, 2
    %p29 = por %p27, %p28
    %p30 = scmp.ne.s32.totalorder %s22, %s25
    %p31 = scmp.eq.s32.totalorder %s12, 0
    %p32 = por %p30, %p31
    %p33 = scmp.ne.s32.totalorder %s22, %s25
    %p34 = scmp.eq.s32.totalorder %s17, 2
    %p35 = por %p33, %p34
    %p36 = scmp.ne.s32.totalorder %s25, %s26
    %p37 = scmp.eq.s32.totalorder %s17, 0
    %p38 = por %p36, %p37
    %p39 = scmp.ne.s32.totalorder %s25, %s26
    %p40 = scmp.eq.s32.totalorder %s18, 2
    %p41 = por %p39, %p40
    %p43 = scmp.ne.s32.totalorder %s26, %s42
    %p44 = scmp.eq.s32.totalorder %s18, 0
    %p45 = por %p43, %p44
    %s47 = sadd.s32 %s46, 1
    %p50 = scmp.eq.s32.totalorder %s12, 2
    %p51 = scmp.ne.s32.totalorder %s46, %s48
    %p52 = scmp.eq.s32.totalorder %s12, 0
    %p53 = por %p51, %p52
    %p54 = scmp.ne.s32.totalorder %s46, %s48
    %p55 = scmp.eq.s32.totalorder %s17, 2
    %p56 = por %p54, %p55
    %p57 = scmp.ne.s32.totalorder %s48, %s49
    %p58 = scmp.eq.s32.totalorder %s17, 0
    %p59 = por %p57, %p58
    %p60 = scmp.ne.s32.totalorder %s48, %s49
    %p61 = scmp.eq.s32.totalorder %s18, 2
    %p62 = por %p60, %p61
    %p64 = scmp.ne.s32.totalorder %s49, %s63
    %p65 = scmp.eq.s32.totalorder %s18, 0
    %p66 = por %p64, %p65
    %s68 = sadd.s32 %s67, 1
    %p71 = scmp.eq.s32.totalorder %s12, 2
    %p72 = scmp.ne.s32.totalorder %s67, %s69
    %p73 = scmp.eq.s32.totalorder %s12, 0
    %p74 = por %p72, %p73
    %p75 = scmp.ne.s32.totalorder %s67, %s69
    %p76 = scmp.eq.s32.totalorder %s17, 2
    %p77 = por %p75, %p76
    %p78 = scmp.ne.s32.totalorder %s69, %s70
    %p79 = scmp.eq.s32.totalorder %s17, 0
    %p80 = por %p78, %p79
    %p81 = scmp.ne.s32.totalorder %s69, %s70
    %p82 = scmp.eq.s32.totalorder %s18, 2
    %p83 = por %p81, %p82
    %p85 = scmp.ne.s32.totalorder %s70, %s84
    %p86 = scmp.eq.s32.totalorder %s18, 0
    %p87 = por %p85, %p86
    %s89 = sadd.s32 %s88, 1
    %p92 = scmp.eq.s32.totalorder %s12, 2
    %p93 = scmp.ne.s32.totalorder %s88, %s90
    %p94 = scmp.eq.s32.totalorder %s12, 0
    %p95 = por %p93, %p94
    %p96 = scmp.ne.s32.totalorder %s88, %s90
    %p97 = scmp.eq.s32.totalorder %s17, 2
    %p98 = por %p96, %p97
    %p99 = scmp.ne.s32.totalorder %s90, %s91
    %p100 = scmp.eq.s32.totalorder %s17, 0
    %p101 = por %p99, %p100
    %p102 = scmp.ne.s32.totalorder %s90, %s91
    %p103 = scmp.eq.s32.totalorder %s18, 2
    %p104 = por %p102, %p103
    %p106 = scmp.ne.s32.totalorder %s91, %s105
    %p107 = scmp.eq.s32.totalorder %s18, 0
    %p108 = por %p106, %p107
    %s110 = sadd.s32 %s109, 1
    %p113 = scmp.eq.s32.totalorder %s12, 2
    %p114 = scmp.ne.s32.totalorder %s109, %s111
    %p115 = scmp.eq.s32.totalorder %s12, 0
    %p116 = por %p114, %p115
    %p117 = scmp.ne.s32.totalorder %s109, %s111
    %p118 = scmp.eq.s32.totalorder %s17, 2
    %p119 = por %p117, %p118
    %p120 = scmp.ne.s32.totalorder %s111, %s112
    %p121 = scmp.eq.s32.totalorder %s17, 0
    %p122 = por %p120, %p121
    %p123 = scmp.ne.s32.totalorder %s111, %s112
    %p124 = scmp.eq.s32.totalorder %s18, 2
    %p125 = por %p123, %p124
    %p127 = scmp.ne.s32.totalorder %s112, %s126
    %p128 = scmp.eq.s32.totalorder %s18, 0
    %p129 = por %p127, %p128
    %s131 = sadd.s32 %s130, 1
    %p134 = scmp.eq.s32.totalorder %s12, 2
    %p135 = scmp.ne.s32.totalorder %s130, %s132
    %p136 = scmp.eq.s32.totalorder %s12, 0
    %p137 = por %p135, %p136
    %p138 = scmp.ne.s32.totalorder %s130, %s132
    %p139 = scmp.eq.s32.totalorder %s17, 2
    %p140 = por %p138, %p139
    %p141 = scmp.ne.s32.totalorder %s132, %s133
    %p142 = scmp.eq.s32.totalorder %s17, 0
    %p143 = por %p141, %p142
    %p144 = scmp.ne.s32.totalorder %s132, %s133
    %p145 = scmp.eq.s32.totalorder %s18, 2
    %p146 = por %p144, %p145
    %p148 = scmp.ne.s32.totalorder %s133, %s147
    %p149 = scmp.eq.s32.totalorder %s18, 0
    %p150 = por %p148, %p149
    %s151 = ssub.s32 %s12, %s19
    %p152 = scmp.eq.s32.totalorder %s151, 0
    %s154 = sadd.s32 %s153, 1
    %s155 = scalar_select %p152, %s153, %s154
    %p158 = pneg %p152
    %p159 = scmp.eq.s32.totalorder %s12, 2
    %p160 = por %p158, %p159
    %p161 = scmp.ne.s32.totalorder %s153, %s156
    %p162 = scmp.eq.s32.totalorder %s12, 0
    %p163 = por %p161, %p162
    %p164 = scmp.ne.s32.totalorder %s153, %s156
    %p165 = scmp.eq.s32.totalorder %s17, 2
    %p166 = por %p164, %p165
    %p167 = scmp.ne.s32.totalorder %s156, %s157
    %p168 = scmp.eq.s32.totalorder %s17, 0
    %p169 = por %p167, %p168
    %p170 = scmp.ne.s32.totalorder %s156, %s157
    %p171 = scmp.eq.s32.totalorder %s18, 2
    %p172 = por %p170, %p171
    %p174 = scmp.ne.s32.totalorder %s157, %s173
    %p175 = scmp.eq.s32.totalorder %s18, 0
    %p176 = por %p174, %p175
    %p177 = scmp.le.s32.totalorder 1, %s12
    %p178 = scmp.lt.s32.totalorder %s12, 4
    %p179 = pnand %p177, %p178
    %p180 = pneg %p179
    // Predicated region
    $region9: #{embedding_watchman_mlp.1} parent=5 // pred_check
      _
    $region10: #{embedding_watchman_mlp.1} parent=5 // pred_check_branch
      %182 = sbr.rel (%p179) target = $region12
    $region11: #{embedding_watchman_mlp.1} parent=5 // pred_region
      %s183 = ssub.s32 %s12, 1
      // Predicated region
      $region13: #{embedding_watchman_mlp.1} parent=11 // pred_check
        %p184 = pneg %p59
      $region14: #{embedding_watchman_mlp.1} parent=11 // pred_check_branch
        %186 = sbr.rel (%p184) target = $region16
      $region15: #{embedding_watchman_mlp.1} parent=11 // pred_region
        _
      $region16: #{embedding_watchman_mlp.1} parent=11 // pred_fallthru
        _
      // Predicated region
      $region17: #{embedding_watchman_mlp.1} parent=11 // pred_check
        %p187 = pneg %p80
      $region18: #{embedding_watchman_mlp.1} parent=11 // pred_check_branch
        %189 = sbr.rel (%p187) target = $region20
      $region19: #{embedding_watchman_mlp.1} parent=11 // pred_region
        _
      $region20: #{embedding_watchman_mlp.1} parent=11 // pred_fallthru
        _
      // Predicated region
      $region21: #{embedding_watchman_mlp.1} parent=11 // pred_check
        %p190 = pneg %p101
      $region22: #{embedding_watchman_mlp.1} parent=11 // pred_check_branch
        %192 = sbr.rel (%p190) target = $region24
      $region23: #{embedding_watchman_mlp.1} parent=11 // pred_region
        _
      $region24: #{embedding_watchman_mlp.1} parent=11 // pred_fallthru
        _
      // Predicated region
      $region25: #{embedding_watchman_mlp.1} parent=11 // pred_check
        %p193 = pneg %p122
      $region26: #{embedding_watchman_mlp.1} parent=11 // pred_check_branch
        %195 = sbr.rel (%p193) target = $region28
      $region27: #{embedding_watchman_mlp.1} parent=11 // pred_region
        _
      $region28: #{embedding_watchman_mlp.1} parent=11 // pred_fallthru
        _
      // Predicated region
      $region29: #{embedding_watchman_mlp.1} parent=11 // pred_check
        %p196 = pneg %p143
      $region30: #{embedding_watchman_mlp.1} parent=11 // pred_check_branch
        %198 = sbr.rel (%p196) target = $region32
      $region31: #{embedding_watchman_mlp.1} parent=11 // pred_region
        _
      $region32: #{embedding_watchman_mlp.1} parent=11 // pred_fallthru
        _
    $region12: #{embedding_watchman_mlp.1} parent=5 // pred_fallthru
      _
    %p199 = scmp.lt.s32.totalorder %s12, 3
    // Predicated region
    $region33: #{embedding_watchman_mlp.1} parent=5 // pred_check
      %p200 = pneg %p199
    $region34: #{embedding_watchman_mlp.1} parent=5 // pred_check_branch
      %202 = sbr.rel (%p200) target = $region36
    $region35: #{embedding_watchman_mlp.1} parent=5 // pred_region
      // Predicated region
      $region37: #{embedding_watchman_mlp.1} parent=35 // pred_check
        %p203 = pneg %p32
      $region38: #{embedding_watchman_mlp.1} parent=35 // pred_check_branch
        %205 = sbr.rel (%p203) target = $region40
      $region39: #{embedding_watchman_mlp.1} parent=35 // pred_region
        %s206 = smul.u32 2, %s12
        %p207 = scmp.lt.s32.totalorder %s206, 5
        %s208 = scalar_select %p207, %s206, 5
        %s209 = smul.addr %s208, 4
        %s210 = scalar_lea.vmem %s0, %s209
        %s211 = smul.u32 2, %s12
      $region40: #{embedding_watchman_mlp.1} parent=35 // pred_fallthru
        _
    $region36: #{embedding_watchman_mlp.1} parent=5 // pred_fallthru
      _
    %p212 = scmp.le.s32.totalorder 1, %s12
    %p213 = scmp.lt.s32.totalorder %s12, 4
    %p214 = pnand %p212, %p213
    %p215 = pneg %p214
    // Predicated region
    $region41: #{embedding_watchman_mlp.1} parent=5 // pred_check
      _
    $region42: #{embedding_watchman_mlp.1} parent=5 // pred_check_branch
      %217 = sbr.rel (%p214) target = $region44
    $region43: #{embedding_watchman_mlp.1} parent=5 // pred_region
      %s218 = ssub.s32 %s12, 1
      %s219 = smul.u32 2, %s17
      %p220 = scmp.lt.s32.totalorder %s219, 5
      %s221 = scalar_select %p220, %s219, 5
      %s222 = smul.addr %s221, 4
      %s223 = scalar_lea.vmem %s0, %s222
      %p224 = pneg %p38
      %p225 = pneg %p35
      %p226 = pneg %p59
      %p227 = pneg %p56
      %p228 = pneg %p80
      %p229 = pneg %p77
      %p230 = pneg %p101
      %p231 = pneg %p98
      %p232 = pneg %p122
      %p233 = pneg %p119
      %p234 = pneg %p143
      %p235 = pneg %p140
      %p236 = pneg %p169
      %p237 = pneg %p166
      %s238 = smul.u32 2, %s17
      %p239 = scmp.lt.s32.totalorder %s238, 5
      %s240 = scalar_select %p239, %s238, 5
      %s241 = smul.addr %s240, 8
      %s242 = scalar_lea.vmem %s6, %s241
      %s243 = smul.u32 2, %s17
      %p244 = scmp.lt.s32.totalorder %s243, 5
      %s245 = scalar_select %p244, %s243, 5
      %s246 = smul.addr %s245, 4
      %s247 = scalar_lea.vmem %s0, %s246
      %s248 = smul.u32 2, %s17
      %s249 = smul.u32 2, %s17
      %p250 = scmp.lt.s32.totalorder %s249, 5
      %s251 = scalar_select %p250, %s249, 5
      %s252 = smul.addr %s251, 8
      %s253 = scalar_lea.vmem %s6, %s252
      %s254 = smul.u32 2, %s17
      %v256 = vld [vmem:[%s247] sm:$0xf]
      %v257 = vld [vmem:[%s247 + $0x4] sm:$0xf]
      %v258 = vld [vmem:[%s1] sm:$0xf]
      %v259 = vld [vmem:[%s1 + $0x4] sm:$0xf]
      %v260 = vld [vmem:[%s1 + $0x8] sm:$0xf]
      %v261 = vld [vmem:[%s1 + $0xc] sm:$0xf]
      %v262 = vld [vmem:[%s1 + $0x10] sm:$0xf]
      %v263 = vld [vmem:[%s1 + $0x14] sm:$0xf]
      %v264 = vld [vmem:[%s1 + $0x18] sm:$0xf]
      %v265 = vld [vmem:[%s1 + $0x1c] sm:$0xf]
      %v266 = vld [vmem:[%s1 + $0x20] sm:$0xf]
      %v267 = vld [vmem:[%s1 + $0x24] sm:$0xf]
      %v268 = vld [vmem:[%s1 + $0x28] sm:$0xf]
      %v269 = vld [vmem:[%s1 + $0x2c] sm:$0xf]
      %v270 = vld [vmem:[%s1 + $0x30] sm:$0xf]
      %v271 = vld [vmem:[%s1 + $0x34] sm:$0xf]
      %v272 = vld [vmem:[%s1 + $0x38] sm:$0xf]
      %v273 = vld [vmem:[%s1 + $0x3c] sm:$0xf]
      %v274 = vld [vmem:[%s5] sm:$0x1]
      %v275 = vlaneseq
      %v276 = vshrl.u32 %v275, 7
      %v277 = vsub.s32 0, %v276
      %v278 = vrot.slane %v274, %v277
      %v281 = vunpack.c.l.b16 %v256
      %v282 = vunpack.c.l.b16 %v257
      %v283 = vpack.c.b16 %v282, %v281
      %v301 = vunpack.c.l.b16 %v258
      %v302 = vunpack.c.l.b16 %v259
      %v303 = vunpack.c.l.b16 %v260
      %v304 = vunpack.c.l.b16 %v261
      %v305 = vunpack.c.l.b16 %v262
      %v306 = vunpack.c.l.b16 %v263
      %v307 = vunpack.c.l.b16 %v264
      %v308 = vunpack.c.l.b16 %v265
      %v309 = vunpack.c.l.b16 %v266
      %v310 = vunpack.c.l.b16 %v267
      %v311 = vunpack.c.l.b16 %v268
      %v312 = vunpack.c.l.b16 %v269
      %v313 = vunpack.c.l.b16 %v270
      %v314 = vunpack.c.l.b16 %v271
      %v315 = vunpack.c.l.b16 %v272
      %v316 = vunpack.c.l.b16 %v273
      %v317 = vpack.c.b16 %v302, %v301
      %v318 = vpack.c.b16 %v304, %v303
      %v319 = vpack.c.b16 %v306, %v305
      %v320 = vpack.c.b16 %v308, %v307
      %v321 = vpack.c.b16 %v310, %v309
      %v322 = vpack.c.b16 %v312, %v311
      %v323 = vpack.c.b16 %v314, %v313
      %v324 = vpack.c.b16 %v316, %v315
      %333 = vmatprep.subr.bf16.mxu0 0
      %334 = vmatpush1.bf16.msra.mxu0 %v317
      %335 = vmatprep.subr.bf16.mxu0 0
      %336 = vmatpush1.bf16.msra.mxu0 %v318
      %337 = vmatprep.subr.bf16.mxu0 0
      %338 = vmatpush1.bf16.msra.mxu0 %v319
      %339 = vmatprep.subr.bf16.mxu0 0
      %340 = vmatpush1.bf16.msra.mxu0 %v320
      %341 = vmatprep.subr.bf16.mxu0 0
      %342 = vmatpush1.bf16.msra.mxu0 %v321
      %343 = vmatprep.subr.bf16.mxu0 0
      %344 = vmatpush1.bf16.msra.mxu0 %v322
      %345 = vmatprep.subr.bf16.mxu0 0
      %346 = vmatpush1.bf16.msra.mxu0 %v323
      %347 = vmatprep.subr.bf16.mxu0 0
      %348 = vmatpush1.bf16.msra.mxu0 %v324
      %349 = vmatprep.subr.bf16.mxu0 0
      %350 = vmatpush1.bf16.msra.mxu0 0
      %351 = vmatprep.subr.bf16.mxu0 0
      %352 = vmatpush1.bf16.msra.mxu0 0
      %353 = vmatprep.subr.bf16.mxu0 0
      %354 = vmatpush1.bf16.msra.mxu0 0
      %355 = vmatprep.subr.bf16.mxu0 0
      %356 = vmatpush1.bf16.msra.mxu0 0
      %357 = vmatprep.subr.bf16.mxu0 0
      %358 = vmatpush1.bf16.msra.mxu0 0
      %359 = vmatprep.subr.bf16.mxu0 0
      %360 = vmatpush1.bf16.msra.mxu0 0
      %361 = vmatprep.subr.bf16.mxu0 0
      %362 = vmatpush1.bf16.msra.mxu0 0
      %363 = vmatprep.subr.bf16.mxu0 0
      %364 = vmatpush1.bf16.msra.mxu0 0
      %365 = vmatprep.mubr.bf16.mxu0 0
      %366 = vmatmul.mubr.bf16.gmra.mrb[0].mxu0 %v283
      %v367 = vpop.f32.mrb[0].mxu0
      %v368 = vadd.f32 %v278, %v367
      %v369 = vpop.f32.mrb[0].mxu0
      %v370 = vpop.f32.mrb[0].mxu0
      %v371 = vadd.f32 %v278, %v370
      %v372 = vpop.f32.mrb[0].mxu0
      %373 = vdwg.mxu0
      %v374 = vmax.f32 %v368, 0.0
      %v375 = vmax.f32 %v371, 0.0
      %v376 = vpack.c.bf16 %v375, %v374
      %v377 = vld [vmem:[%s2] sm:$0xf]
      %v378 = vld [vmem:[%s2 + $0x4] sm:$0xf]
      %v379 = vld [vmem:[%s2 + $0x8] sm:$0xf]
      %v380 = vld [vmem:[%s2 + $0xc] sm:$0xf]
      %v381 = vld [vmem:[%s2 + $0x10] sm:$0xf]
      %v382 = vld [vmem:[%s2 + $0x14] sm:$0xf]
      %v383 = vld [vmem:[%s2 + $0x18] sm:$0xf]
      %v384 = vld [vmem:[%s2 + $0x1c] sm:$0xf]
      %v385 = vld [vmem:[%s2 + $0x20] sm:$0xf]
      %v386 = vld [vmem:[%s2 + $0x24] sm:$0xf]
      %v387 = vld [vmem:[%s2 + $0x28] sm:$0xf]
      %v388 = vld [vmem:[%s2 + $0x2c] sm:$0xf]
      %v389 = vld [vmem:[%s2 + $0x30] sm:$0xf]
      %v390 = vld [vmem:[%s2 + $0x34] sm:$0xf]
      %v391 = vld [vmem:[%s2 + $0x38] sm:$0xf]
      %v392 = vld [vmem:[%s2 + $0x3c] sm:$0xf]
      %v393 = vld [vmem:[%s5 + $0x1] sm:$0x1]
      %v394 = vlaneseq
      %v395 = vshrl.u32 %v394, 7
      %v396 = vsub.s32 0, %v395
      %v397 = vrot.slane %v393, %v396
      %v414 = vunpack.c.l.b16 %v377
      %v415 = vunpack.c.l.b16 %v378
      %v416 = vunpack.c.l.b16 %v379
      %v417 = vunpack.c.l.b16 %v380
      %v418 = vunpack.c.l.b16 %v381
      %v419 = vunpack.c.l.b16 %v382
      %v420 = vunpack.c.l.b16 %v383
      %v421 = vunpack.c.l.b16 %v384
      %v422 = vunpack.c.l.b16 %v385
      %v423 = vunpack.c.l.b16 %v386
      %v424 = vunpack.c.l.b16 %v387
      %v425 = vunpack.c.l.b16 %v388
      %v426 = vunpack.c.l.b16 %v389
      %v427 = vunpack.c.l.b16 %v390
      %v428 = vunpack.c.l.b16 %v391
      %v429 = vunpack.c.l.b16 %v392
      %v430 = vpack.c.b16 %v415, %v414
      %v431 = vpack.c.b16 %v417, %v416
      %v432 = vpack.c.b16 %v419, %v418
      %v433 = vpack.c.b16 %v421, %v420
      %v434 = vpack.c.b16 %v423, %v422
      %v435 = vpack.c.b16 %v425, %v424
      %v436 = vpack.c.b16 %v427, %v426
      %v437 = vpack.c.b16 %v429, %v428
      %446 = vmatprep.subr.bf16.mxu0 0
      %447 = vmatpush1.bf16.msra.mxu0 %v430
      %448 = vmatprep.subr.bf16.mxu0 0
      %449 = vmatpush1.bf16.msra.mxu0 %v431
      %450 = vmatprep.subr.bf16.mxu0 0
      %451 = vmatpush1.bf16.msra.mxu0 %v432
      %452 = vmatprep.subr.bf16.mxu0 0
      %453 = vmatpush1.bf16.msra.mxu0 %v433
      %454 = vmatprep.subr.bf16.mxu0 0
      %455 = vmatpush1.bf16.msra.mxu0 %v434
      %456 = vmatprep.subr.bf16.mxu0 0
      %457 = vmatpush1.bf16.msra.mxu0 %v435
      %458 = vmatprep.subr.bf16.mxu0 0
      %459 = vmatpush1.bf16.msra.mxu0 %v436
      %460 = vmatprep.subr.bf16.mxu0 0
      %461 = vmatpush1.bf16.msra.mxu0 %v437
      %462 = vmatprep.subr.bf16.mxu0 0
      %463 = vmatpush1.bf16.msra.mxu0 0
      %464 = vmatprep.subr.bf16.mxu0 0
      %465 = vmatpush1.bf16.msra.mxu0 0
      %466 = vmatprep.subr.bf16.mxu0 0
      %467 = vmatpush1.bf16.msra.mxu0 0
      %468 = vmatprep.subr.bf16.mxu0 0
      %469 = vmatpush1.bf16.msra.mxu0 0
      %470 = vmatprep.subr.bf16.mxu0 0
      %471 = vmatpush1.bf16.msra.mxu0 0
      %472 = vmatprep.subr.bf16.mxu0 0
      %473 = vmatpush1.bf16.msra.mxu0 0
      %474 = vmatprep.subr.bf16.mxu0 0
      %475 = vmatpush1.bf16.msra.mxu0 0
      %476 = vmatprep.subr.bf16.mxu0 0
      %477 = vmatpush1.bf16.msra.mxu0 0
      %478 = vmatprep.mubr.bf16.mxu0 0
      %479 = vmatmul.mubr.bf16.gmra.mrb[0].mxu0 %v376
      %v480 = vpop.f32.mrb[0].mxu0
      %v481 = vadd.f32 %v397, %v480
      %v482 = vpop.f32.mrb[0].mxu0
      %v483 = vpop.f32.mrb[0].mxu0
      %v484 = vadd.f32 %v397, %v483
      %v485 = vpop.f32.mrb[0].mxu0
      %486 = vdwg.mxu0
      %v487 = vmax.f32 %v481, 0.0
      %v488 = vmax.f32 %v484, 0.0
      %v489 = vpack.c.bf16 %v488, %v487
      %v490 = vld [vmem:[%s3] sm:$0xf]
      %v491 = vld [vmem:[%s3 + $0x4] sm:$0xf]
      %v492 = vld [vmem:[%s3 + $0x8] sm:$0xf]
      %v493 = vld [vmem:[%s3 + $0xc] sm:$0xf]
      %v494 = vld [vmem:[%s3 + $0x10] sm:$0xf]
      %v495 = vld [vmem:[%s3 + $0x14] sm:$0xf]
      %v496 = vld [vmem:[%s3 + $0x18] sm:$0xf]
      %v497 = vld [vmem:[%s3 + $0x1c] sm:$0xf]
      %v498 = vld [vmem:[%s3 + $0x20] sm:$0xf]
      %v499 = vld [vmem:[%s3 + $0x24] sm:$0xf]
      %v500 = vld [vmem:[%s3 + $0x28] sm:$0xf]
      %v501 = vld [vmem:[%s3 + $0x2c] sm:$0xf]
      %v502 = vld [vmem:[%s3 + $0x30] sm:$0xf]
      %v503 = vld [vmem:[%s3 + $0x34] sm:$0xf]
      %v504 = vld [vmem:[%s3 + $0x38] sm:$0xf]
      %v505 = vld [vmem:[%s3 + $0x3c] sm:$0xf]
      %v506 = vld [vmem:[%s5 + $0x2] sm:$0x1]
      %v507 = vlaneseq
      %v508 = vshrl.u32 %v507, 7
      %v509 = vsub.s32 0, %v508
      %v510 = vrot.slane %v506, %v509
      %v527 = vunpack.c.l.b16 %v490
      %v528 = vunpack.c.l.b16 %v491
      %v529 = vunpack.c.l.b16 %v492
      %v530 = vunpack.c.l.b16 %v493
      %v531 = vunpack.c.l.b16 %v494
      %v532 = vunpack.c.l.b16 %v495
      %v533 = vunpack.c.l.b16 %v496
      %v534 = vunpack.c.l.b16 %v497
      %v535 = vunpack.c.l.b16 %v498
      %v536 = vunpack.c.l.b16 %v499
      %v537 = vunpack.c.l.b16 %v500
      %v538 = vunpack.c.l.b16 %v501
      %v539 = vunpack.c.l.b16 %v502
      %v540 = vunpack.c.l.b16 %v503
      %v541 = vunpack.c.l.b16 %v504
      %v542 = vunpack.c.l.b16 %v505
      %v543 = vpack.c.b16 %v528, %v527
      %v544 = vpack.c.b16 %v530, %v529
      %v545 = vpack.c.b16 %v532, %v531
      %v546 = vpack.c.b16 %v534, %v533
      %v547 = vpack.c.b16 %v536, %v535
      %v548 = vpack.c.b16 %v538, %v537
      %v549 = vpack.c.b16 %v540, %v539
      %v550 = vpack.c.b16 %v542, %v541
      %559 = vmatprep.subr.bf16.mxu0 0
      %560 = vmatpush1.bf16.msra.mxu0 %v543
      %561 = vmatprep.subr.bf16.mxu0 0
      %562 = vmatpush1.bf16.msra.mxu0 %v544
      %563 = vmatprep.subr.bf16.mxu0 0
      %564 = vmatpush1.bf16.msra.mxu0 %v545
      %565 = vmatprep.subr.bf16.mxu0 0
      %566 = vmatpush1.bf16.msra.mxu0 %v546
      %567 = vmatprep.subr.bf16.mxu0 0
      %568 = vmatpush1.bf16.msra.mxu0 %v547
      %569 = vmatprep.subr.bf16.mxu0 0
      %570 = vmatpush1.bf16.msra.mxu0 %v548
      %571 = vmatprep.subr.bf16.mxu0 0
      %572 = vmatpush1.bf16.msra.mxu0 %v549
      %573 = vmatprep.subr.bf16.mxu0 0
      %574 = vmatpush1.bf16.msra.mxu0 %v550
      %575 = vmatprep.subr.bf16.mxu0 0
      %576 = vmatpush1.bf16.msra.mxu0 0
      %577 = vmatprep.subr.bf16.mxu0 0
      %578 = vmatpush1.bf16.msra.mxu0 0
      %579 = vmatprep.subr.bf16.mxu0 0
      %580 = vmatpush1.bf16.msra.mxu0 0
      %581 = vmatprep.subr.bf16.mxu0 0
      %582 = vmatpush1.bf16.msra.mxu0 0
      %583 = vmatprep.subr.bf16.mxu0 0
      %584 = vmatpush1.bf16.msra.mxu0 0
      %585 = vmatprep.subr.bf16.mxu0 0
      %586 = vmatpush1.bf16.msra.mxu0 0
      %587 = vmatprep.subr.bf16.mxu0 0
      %588 = vmatpush1.bf16.msra.mxu0 0
      %589 = vmatprep.subr.bf16.mxu0 0
      %590 = vmatpush1.bf16.msra.mxu0 0
      %591 = vmatprep.mubr.bf16.mxu0 0
      %592 = vmatmul.mubr.bf16.gmra.mrb[0].mxu0 %v489
      %v593 = vpop.f32.mrb[0].mxu0
      %v594 = vadd.f32 %v510, %v593
      %v595 = vpop.f32.mrb[0].mxu0
      %v596 = vpop.f32.mrb[0].mxu0
      %v597 = vadd.f32 %v510, %v596
      %v598 = vpop.f32.mrb[0].mxu0
      %599 = vdwg.mxu0
      %v600 = vmax.f32 %v594, 0.0
      %v601 = vmax.f32 %v597, 0.0
      %v602 = vpack.c.bf16 %v601, %v600
      %v603 = vld [vmem:[%s4] sm:$0xf]
      %v604 = vld [vmem:[%s4 + $0x4] sm:$0xf]
      %v605 = vld [vmem:[%s4 + $0x8] sm:$0xf]
      %v606 = vld [vmem:[%s4 + $0xc] sm:$0xf]
      %v607 = vld [vmem:[%s4 + $0x10] sm:$0xf]
      %v608 = vld [vmem:[%s4 + $0x14] sm:$0xf]
      %v609 = vld [vmem:[%s4 + $0x18] sm:$0xf]
      %v610 = vld [vmem:[%s4 + $0x1c] sm:$0xf]
      %v611 = vld [vmem:[%s4 + $0x20] sm:$0xf]
      %v612 = vld [vmem:[%s4 + $0x24] sm:$0xf]
      %v613 = vld [vmem:[%s4 + $0x28] sm:$0xf]
      %v614 = vld [vmem:[%s4 + $0x2c] sm:$0xf]
      %v615 = vld [vmem:[%s4 + $0x30] sm:$0xf]
      %v616 = vld [vmem:[%s4 + $0x34] sm:$0xf]
      %v617 = vld [vmem:[%s4 + $0x38] sm:$0xf]
      %v618 = vld [vmem:[%s4 + $0x3c] sm:$0xf]
      %v619 = vld [vmem:[%s5 + $0x3] sm:$0x1]
      %v620 = vlaneseq
      %v621 = vshrl.u32 %v620, 7
      %v622 = vsub.s32 0, %v621
      %v623 = vrot.slane %v619, %v622
      %v640 = vunpack.c.l.b16 %v603
      %v641 = vunpack.c.l.b16 %v604
      %v642 = vunpack.c.l.b16 %v605
      %v643 = vunpack.c.l.b16 %v606
      %v644 = vunpack.c.l.b16 %v607
      %v645 = vunpack.c.l.b16 %v608
      %v646 = vunpack.c.l.b16 %v609
      %v647 = vunpack.c.l.b16 %v610
      %v648 = vunpack.c.l.b16 %v611
      %v649 = vunpack.c.l.b16 %v612
      %v650 = vunpack.c.l.b16 %v613
      %v651 = vunpack.c.l.b16 %v614
      %v652 = vunpack.c.l.b16 %v615
      %v653 = vunpack.c.l.b16 %v616
      %v654 = vunpack.c.l.b16 %v617
      %v655 = vunpack.c.l.b16 %v618
      %v656 = vpack.c.b16 %v641, %v640
      %v657 = vpack.c.b16 %v643, %v642
      %v658 = vpack.c.b16 %v645, %v644
      %v659 = vpack.c.b16 %v647, %v646
      %v660 = vpack.c.b16 %v649, %v648
      %v661 = vpack.c.b16 %v651, %v650
      %v662 = vpack.c.b16 %v653, %v652
      %v663 = vpack.c.b16 %v655, %v654
      %672 = vmatprep.subr.bf16.mxu0 0
      %673 = vmatpush1.bf16.msra.mxu0 %v656
      %674 = vmatprep.subr.bf16.mxu0 0
      %675 = vmatpush1.bf16.msra.mxu0 %v657
      %676 = vmatprep.subr.bf16.mxu0 0
      %677 = vmatpush1.bf16.msra.mxu0 %v658
      %678 = vmatprep.subr.bf16.mxu0 0
      %679 = vmatpush1.bf16.msra.mxu0 %v659
      %680 = vmatprep.subr.bf16.mxu0 0
      %681 = vmatpush1.bf16.msra.mxu0 %v660
      %682 = vmatprep.subr.bf16.mxu0 0
      %683 = vmatpush1.bf16.msra.mxu0 %v661
      %684 = vmatprep.subr.bf16.mxu0 0
      %685 = vmatpush1.bf16.msra.mxu0 %v662
      %686 = vmatprep.subr.bf16.mxu0 0
      %687 = vmatpush1.bf16.msra.mxu0 %v663
      %688 = vmatprep.subr.bf16.mxu0 0
      %689 = vmatpush1.bf16.msra.mxu0 0
      %690 = vmatprep.subr.bf16.mxu0 0
      %691 = vmatpush1.bf16.msra.mxu0 0
      %692 = vmatprep.subr.bf16.mxu0 0
      %693 = vmatpush1.bf16.msra.mxu0 0
      %694 = vmatprep.subr.bf16.mxu0 0
      %695 = vmatpush1.bf16.msra.mxu0 0
      %696 = vmatprep.subr.bf16.mxu0 0
      %697 = vmatpush1.bf16.msra.mxu0 0
      %698 = vmatprep.subr.bf16.mxu0 0
      %699 = vmatpush1.bf16.msra.mxu0 0
      %700 = vmatprep.subr.bf16.mxu0 0
      %701 = vmatpush1.bf16.msra.mxu0 0
      %702 = vmatprep.subr.bf16.mxu0 0
      %703 = vmatpush1.bf16.msra.mxu0 0
      %704 = vmatprep.mubr.bf16.mxu0 0
      %705 = vmatmul.mubr.bf16.gmra.mrb[0].mxu0 %v602
      %v706 = vpop.f32.mrb[0].mxu0
      %v707 = vadd.f32 %v623, %v706
      %v708 = vpop.f32.mrb[0].mxu0
      %v709 = vpop.f32.mrb[0].mxu0
      %v710 = vadd.f32 %v623, %v709
      %v711 = vpop.f32.mrb[0].mxu0
      %712 = vdwg.mxu0
      %v713 = vmax.f32 %v707, 0.0
      %v714 = vmax.f32 %v710, 0.0
      %715 = vst [vmem:[%s253] sm:$0xff] %v713
      %716 = vst [vmem:[%s253 + $0x8] sm:$0xff] %v714
      %s717 = smul.u32 2, %s17
      %p718 = scmp.lt.s32.totalorder %s717, 5
      %s719 = scalar_select %p718, %s717, 5
      %s720 = smul.addr %s719, 8
      %s721 = scalar_lea.vmem %s6, %s720
      // Predicated region
      $region45: #{embedding_watchman_mlp.1} parent=43 // pred_check
        %p722 = pneg %p166
      $region46: #{embedding_watchman_mlp.1} parent=43 // pred_check_branch
        %724 = sbr.rel (%p722) target = $region48
      $region47: #{embedding_watchman_mlp.1} parent=43 // pred_region
        %s725 = smul.u32 2, %s17
      $region48: #{embedding_watchman_mlp.1} parent=43 // pred_fallthru
        _
    $region44: #{embedding_watchman_mlp.1} parent=5 // pred_fallthru
      _
    %p726 = scmp.le.s32.totalorder 2, %s12
    // Predicated region
    $region49: #{embedding_watchman_mlp.1} parent=5 // pred_check
      %p727 = pneg %p726
    $region50: #{embedding_watchman_mlp.1} parent=5 // pred_check_branch
      %729 = sbr.rel (%p727) target = $region52
    $region51: #{embedding_watchman_mlp.1} parent=5 // pred_region
      %s730 = ssub.s32 %s12, 2
      // Predicated region
      $region53: #{embedding_watchman_mlp.1} parent=51 // pred_check
        %p731 = pneg %p172
      $region54: #{embedding_watchman_mlp.1} parent=51 // pred_check_branch
        %733 = sbr.rel (%p731) target = $region56
      $region55: #{embedding_watchman_mlp.1} parent=51 // pred_region
        %s734 = smul.u32 2, %s18
        %p735 = scmp.lt.s32.totalorder %s734, 5
        %s736 = scalar_select %p735, %s734, 5
        %s737 = smul.addr %s736, 8
        %s738 = scalar_lea.vmem %s6, %s737
      $region56: #{embedding_watchman_mlp.1} parent=51 // pred_fallthru
        _
    $region52: #{embedding_watchman_mlp.1} parent=5 // pred_fallthru
      _
  $region6: #{embedding_watchman_mlp.1} parent=0 // loop_footer
    %s16 = sadd.s32 1, %s12
  $region7: #{embedding_watchman_mlp.1} parent=0 // loop_footer_branch
    %11 = sbr.rel target = $region3
  $region8: #{embedding_watchman_mlp.1} parent=0 // loop_exit
    _

</llo_original>
